<compile_context>
chip_gen: v7x
topology: tpu7x:2x2x1
jax: 0.10.0
libtpu: 0.0.40
codegen_flags: <defaults>
</compile_context>

<pallas_src>
import math

import jax
import jax.numpy as jnp
from jax.experimental import pallas as pl
from jax.experimental.pallas import tpu as pltpu


def _interaction_kernel(x_ref, w_ref, o_ref):
    # x_ref: (TM, width) streaming tile; w_ref: (width, width) VMEM-resident
    # (block-diagonal) weights; o_ref: (TM, width) output tile.
    acc = jnp.dot(x_ref[...], w_ref[...], preferred_element_type=jnp.float32)
    o_ref[...] = acc.astype(o_ref.dtype)


def _pick_fold(d_model, M):
    """Largest fold f so f*d_model hits a lane-dense width (prefer 256 to fill
    the v6e/v7x 2x256^2 MXU, else 128) and M is divisible by f. 1 = no fold."""
    if d_model % 128 == 0:
        return 1  # already lane-dense
    for target in (256, 128):
        if target % d_model == 0:
            f = target // d_model
            if M % f == 0:
                return f
    return 1


def learnable_feature_interaction(x, interaction_weights, *,
                                  target_step_bytes=2 << 20,
                                  use_pallas=None):
    """x: (B, n_vars, d_model) with d_model == n_vars; weights: (n_vars, n_vars)."""
    batch, n_vars, d_model = x.shape
    nv_in, nv_out = interaction_weights.shape
    assert d_model == nv_in, "torch.matmul(x, W) requires d_model == n_vars"
    assert nv_out == n_vars, "square interaction matrix expected"

    w = interaction_weights.astype(x.dtype)
    itemsize = jnp.dtype(x.dtype).itemsize

    # Size gate: for tiny problems the fixed pallas_call / pipeline setup cost
    # dominates; XLA's fused matmul wins there.
    if use_pallas is None:
        use_pallas = x.size * itemsize >= (1 << 20)
    if not use_pallas:
        return jnp.matmul(x, w)

    # Collapse (batch, n_vars) -> M (free metadata reshape, wrapper-side only).
    M = batch * n_vars

    # Lane-dense fold: (M, d_model) -> (M/f, f*d_model) with block-diagonal W.
    f = _pick_fold(d_model, M)
    width = f * d_model
    Mf = M // f
    x2 = x.reshape(Mf, width)
    if f > 1:
        # f copies of W on the diagonal; built once in the wrapper (layout
        # plumbing, not compute). width^2 * 4 bytes (<= 256 KiB) stays in VMEM.
        w_big = jnp.kron(jnp.eye(f, dtype=w.dtype), w)
    else:
        w_big = w

    # Tile size along the folded M axis:
    #   * aim for ~target_step_bytes of x per grid step (amortize step overhead)
    #   * cap at ~ceil(Mf/2) so grid_m >= 2 whenever possible (v7x megacore)
    #   * round to the packed-sublane multiple of the dtype
    sub = {4: 8, 2: 16, 1: 32}.get(itemsize, 8)
    tm_eff = max(1, min(target_step_bytes // (width * itemsize), Mf))
    if Mf > sub:
        half = ((pl.cdiv(Mf, 2) + sub - 1) // sub) * sub
        tm_eff = min(tm_eff, half)
    if tm_eff < Mf:
        tm_eff = max(sub, (tm_eff // sub) * sub)
    grid_m = pl.cdiv(Mf, tm_eff)

    cost = pl.CostEstimate(
        flops=2 * Mf * width * width,
        transcendentals=0,
        bytes_accessed=2 * Mf * width * itemsize
        + w_big.size * jnp.dtype(w_big.dtype).itemsize,
    )

    out2 = pl.pallas_call(
        _interaction_kernel,
        out_shape=jax.ShapeDtypeStruct((Mf, width), x.dtype),
        grid_spec=pltpu.PrefetchScalarGridSpec(
            num_scalar_prefetch=0,
            grid=(grid_m,),
            in_specs=[
                # Streaming lane-dense x tiles along M.
                # (pipeline_mode=pl.Buffered(3) is a cheap sweep if DMA latency
                #  is still exposed on v7x; default double-buffering kept here.)
                pl.BlockSpec((tm_eff, width), lambda i: (i, 0)),
                # Block-diagonal W: full array, constant index map -> resident.
                pl.BlockSpec((width, width), lambda i: (0, 0)),
            ],
            out_specs=pl.BlockSpec((tm_eff, width), lambda i: (i, 0)),
        ),
        compiler_params=pltpu.CompilerParams(
            dimension_semantics=("parallel",),
            vmem_limit_bytes=48 * 1024 * 1024,
        ),
        cost_estimate=cost,
    )(x2, w_big)

    # Unfold + view(batch, n_vars, d_model) — valid because d_model == n_vars.
    return out2.reshape(batch, n_vars, d_model)


def xavier_uniform(key, shape, dtype=jnp.float32):
    # nn.init.xavier_uniform_ for a (fan_out, fan_in) = (n, n) matrix.
    fan_in, fan_out = shape[1], shape[0]
    bound = math.sqrt(6.0 / (fan_in + fan_out))
    return jax.random.uniform(key, shape, dtype=dtype, minval=-bound, maxval=bound)


if __name__ == "__main__":
    key = jax.random.PRNGKey(0)

    def check(batch, n_vars, d_model, k):
        k_x, k_w = jax.random.split(k)
        x = jax.random.normal(k_x, (batch, n_vars, d_model), dtype=jnp.float32)
        w = xavier_uniform(k_w, (n_vars, n_vars), dtype=jnp.float32)
        # Force the Pallas path so the kernel is exercised at demo sizes.
        out = learnable_feature_interaction(x, w, use_pallas=True)
        out = jax.block_until_ready(out)
        ref = jnp.matmul(x, w)
        assert out.shape == (batch, n_vars, d_model)
        assert jnp.allclose(out, ref, atol=1e-5, rtol=1e-5), "mismatch vs reference"

    k1, k2, k3 = jax.random.split(key, 3)
    check(2, 16, 16, k1)    # lane-dense fold (width=256), single full block
    check(40, 16, 16, k2)   # fold + 2 grid steps with a partial tail block
    check(4, 24, 24, k3)    # no-fold fallback path (24 does not divide 128/256)

    print("KERNEL_OK")
</pallas_src>

<mosaic_0001>
module attributes {stable_mosaic.version = 11 : i64} {
  func.func @_interaction_kernel(%arg0: i32, %arg1: memref<2x256xf32, #tpu.memory_space<vmem>>, %arg2: memref<256x256xf32, #tpu.memory_space<vmem>>, %arg3: memref<2x256xf32, #tpu.memory_space<vmem>>) attributes {dimension_semantics = [#tpu.dimension_semantics<parallel>], iteration_bounds = array<i64: 1>, scalar_prefetch = 0 : i64, scratch_operands = 0 : i64, tpu.core_type = #tpu.core_type<tc>, window_params = [{transform_indices = @transform_0, window_bounds = array<i64: 2, 256>}, {pipeline_mode = #tpu.pipeline_mode<synchronous>, transform_indices = @transform_1, window_bounds = array<i64: 256, 256>}, {transform_indices = @transform_2, window_bounds = array<i64: 2, 256>}]} {
    %c0 = arith.constant 0 : index
    %c0_0 = arith.constant 0 : index
    %0 = vector.load %arg1[%c0, %c0_0] : memref<2x256xf32, #tpu.memory_space<vmem>>, vector<2x256xf32>
    %c0_1 = arith.constant 0 : index
    %c0_2 = arith.constant 0 : index
    %1 = vector.load %arg2[%c0_1, %c0_2] : memref<256x256xf32, #tpu.memory_space<vmem>>, vector<256x256xf32>
    %cst = arith.constant dense<0.000000e+00> : vector<2x256xf32>
    %2 = tpu.matmul %0, %1, %cst {dimension_numbers = #tpu.dot_dimension_numbers<[1], [0], [0], [1], [0, 0, 1, 1], [], []>} : vector<2x256xf32>, vector<256x256xf32>, vector<2x256xf32> -> vector<2x256xf32>
    %c0_3 = arith.constant 0 : index
    %c0_4 = arith.constant 0 : index
    %3 = vector.load %arg3[%c0_3, %c0_4] : memref<2x256xf32, #tpu.memory_space<vmem>>, vector<2x256xf32>
    tpu.vector_store %arg3[%c0_3, %c0_4], %2 {strides = array<i32>} : memref<2x256xf32, #tpu.memory_space<vmem>>, vector<2x256xf32>,
    return
  }
  func.func @transform_0(%arg0: i32) -> (i32, i32) {
    %c0_i32 = arith.constant 0 : i32
    %c0_i32_0 = arith.constant 0 : i32
    return %arg0, %c0_i32 : i32, i32
  }
  func.func @transform_1(%arg0: i32) -> (i32, i32) {
    %c0_i32 = arith.constant 0 : i32
    %c0_i32_0 = arith.constant 0 : i32
    %c0_i32_1 = arith.constant 0 : i32
    return %c0_i32, %c0_i32_0 : i32, i32
  }
  func.func @transform_2(%arg0: i32) -> (i32, i32) {
    %c0_i32 = arith.constant 0 : i32
    %c0_i32_0 = arith.constant 0 : i32
    return %arg0, %c0_i32 : i32, i32
  }
}

</mosaic_0001>

<llo_original>
// kernel: tpu_custom_call.1
$region0: #{tpu_custom_call.1}
  #allocation0 [shape = 'u32[]', space=smem, size = 0x4, offset = 0x4, fixed_abs, tag = 'smem constant byte address 0x4 - core index']
  #allocation1 [shape = 'u32[144,128]{1,0:T(1,128)}', space=vmem, size = 0x12000, scoped, tag = 'internal scratch']
  %s0 = inlined_call_operand.hbm [shape: f32[2,256], index: 0, kind: input, shape index: {}]
  %s1 = inlined_call_operand.hbm [shape: f32[256,256], index: 1, kind: input, shape index: {}]
  %s2 = inlined_call_operand.hbm [shape: f32[2,256], index: 2, kind: output, shape index: {}]
  %s3 = sld [smem:[#allocation0]]
  $region26: #{tpu_custom_call.1} parent=0
    _
  %s5 = ssub.s32 1, %s3
  %s6 = scalar_select 0, %s5, %s3
  $region1: #{tpu_custom_call.1} parent=0
    #allocation2 [shape = 'u8[2048]{0}', space=vmem, size = 0x800, scoped, tag = 'input window, operand 0, single buffered']
    #allocation3 [shape = 's32[1]{0}', space=sflag, size = 0x4, scoped, tag = 'scoped memory for tpu_custom_call.1']
    #allocation4 [shape = 's32[1]{0}', space=sflag, size = 0x4, scoped, tag = 'scoped memory for tpu_custom_call.1']
    #allocation5 [shape = 'u8[262144]{0}', space=vmem, size = 0x40000, scoped, tag = 'input window, operand 1, single buffered']
    #allocation6 [shape = 's32[1]{0}', space=sflag, size = 0x4, scoped, tag = 'scoped memory for tpu_custom_call.1']
    #allocation7 [shape = 'u8[2048]{0}', space=vmem, size = 0x800, scoped, tag = 'output window, operand 0, single buffered']
    %7 = vsyncpa [#allocation3], 0
    %8 = vsyncpa [#allocation6], 0
    %9 = vsyncpa [#allocation4], 0
    // Predicated region
    $region2: #{tpu_custom_call.1} parent=1 // pred_check
      _
    $region3: #{tpu_custom_call.1} parent=1 // pred_check_branch
      %11 = sbr.rel (0) target = $region5
    $region4: #{tpu_custom_call.1} parent=1 // pred_region
      %s13 = ssub.s32 64, 64
      %14 = vsyncadd [#allocation3], %s13
      %s16 = sshll.u32 [#allocation2], 4
      %s17 = int_to_ptr.vmem [resolvable:$true] %s16
      %19 = dma.hbm_to_vmem [thread:$0]  %s0, 64, %s17, [#allocation3]
    $region5: #{tpu_custom_call.1} parent=1 // pred_fallthru
      _
    // Predicated region
    $region6: #{tpu_custom_call.1} parent=1 // pred_check
      _
    $region7: #{tpu_custom_call.1} parent=1 // pred_check_branch
      %21 = sbr.rel (0) target = $region9
    $region8: #{tpu_custom_call.1} parent=1 // pred_region
      %s23 = ssub.s32 8192, 8192
      %24 = vsyncadd [#allocation6], %s23
      %s25 = sshll.u32 [#allocation5], 4
      %s26 = int_to_ptr.vmem [resolvable:$true] %s25
      %31 = dma.hbm_to_vmem [thread:$0]  %s1, 8192, %s26, [#allocation6], 256, 256, 16
    $region9: #{tpu_custom_call.1} parent=1 // pred_fallthru
      _
    // Predicated region
    $region10: #{tpu_custom_call.1} parent=1 // pred_check
      _
    $region11: #{tpu_custom_call.1} parent=1 // pred_check_branch
      %33 = sbr.rel (0) target = $region13
    $region12: #{tpu_custom_call.1} parent=1 // pred_region
      %34 = dma.done [#allocation3], 64
    $region13: #{tpu_custom_call.1} parent=1 // pred_fallthru
      _
    // Predicated region
    $region14: #{tpu_custom_call.1} parent=1 // pred_check
      _
    $region15: #{tpu_custom_call.1} parent=1 // pred_check_branch
      %36 = sbr.rel (0) target = $region17
    $region16: #{tpu_custom_call.1} parent=1 // pred_region
      %37 = dma.done [#allocation6], 8192
    $region17: #{tpu_custom_call.1} parent=1 // pred_fallthru
      _
    %v38 = vld [vmem:[#allocation2] sm:$0xf]
    %v39 = vld [vmem:[#allocation5] sm:$0xff]
    %v40 = vld [vmem:[#allocation5 + $0x8] sm:$0xff]
    %v41 = vld [vmem:[#allocation5 + $0x10] sm:$0xff]
    %v42 = vld [vmem:[#allocation5 + $0x18] sm:$0xff]
    %v43 = vld [vmem:[#allocation5 + $0x20] sm:$0xff]
    %v44 = vld [vmem:[#allocation5 + $0x28] sm:$0xff]
    %v45 = vld [vmem:[#allocation5 + $0x30] sm:$0xff]
    %v46 = vld [vmem:[#allocation5 + $0x38] sm:$0xff]
    %v47 = vld [vmem:[#allocation5 + $0x40] sm:$0xff]
    %v48 = vld [vmem:[#allocation5 + $0x48] sm:$0xff]
    %v49 = vld [vmem:[#allocation5 + $0x50] sm:$0xff]
    %v50 = vld [vmem:[#allocation5 + $0x58] sm:$0xff]
    %v51 = vld [vmem:[#allocation5 + $0x60] sm:$0xff]
    %v52 = vld [vmem:[#allocation5 + $0x68] sm:$0xff]
    %v53 = vld [vmem:[#allocation5 + $0x70] sm:$0xff]
    %v54 = vld [vmem:[#allocation5 + $0x78] sm:$0xff]
    %v55 = vld [vmem:[#allocation5 + $0x80] sm:$0xff]
    %v56 = vld [vmem:[#allocation5 + $0x88] sm:$0xff]
    %v57 = vld [vmem:[#allocation5 + $0x90] sm:$0xff]
    %v58 = vld [vmem:[#allocation5 + $0x98] sm:$0xff]
    %v59 = vld [vmem:[#allocation5 + $0xa0] sm:$0xff]
    %v60 = vld [vmem:[#allocation5 + $0xa8] sm:$0xff]
    %v61 = vld [vmem:[#allocation5 + $0xb0] sm:$0xff]
    %v62 = vld [vmem:[#allocation5 + $0xb8] sm:$0xff]
    %v63 = vld [vmem:[#allocation5 + $0xc0] sm:$0xff]
    %v64 = vld [vmem:[#allocation5 + $0xc8] sm:$0xff]
    %v65 = vld [vmem:[#allocation5 + $0xd0] sm:$0xff]
    %v66 = vld [vmem:[#allocation5 + $0xd8] sm:$0xff]
    %v67 = vld [vmem:[#allocation5 + $0xe0] sm:$0xff]
    %v68 = vld [vmem:[#allocation5 + $0xe8] sm:$0xff]
    %v69 = vld [vmem:[#allocation5 + $0xf0] sm:$0xff]
    %v70 = vld [vmem:[#allocation5 + $0xf8] sm:$0xff]
    %v71 = vld [vmem:[#allocation5 + $0x100] sm:$0xff]
    %v72 = vld [vmem:[#allocation5 + $0x108] sm:$0xff]
    %v73 = vld [vmem:[#allocation5 + $0x110] sm:$0xff]
    %v74 = vld [vmem:[#allocation5 + $0x118] sm:$0xff]
    %v75 = vld [vmem:[#allocation5 + $0x120] sm:$0xff]
    %v76 = vld [vmem:[#allocation5 + $0x128] sm:$0xff]
    %v77 = vld [vmem:[#allocation5 + $0x130] sm:$0xff]
    %v78 = vld [vmem:[#allocation5 + $0x138] sm:$0xff]
    %v79 = vld [vmem:[#allocation5 + $0x140] sm:$0xff]
    %v80 = vld [vmem:[#allocation5 + $0x148] sm:$0xff]
    %v81 = vld [vmem:[#allocation5 + $0x150] sm:$0xff]
    %v82 = vld [vmem:[#allocation5 + $0x158] sm:$0xff]
    %v83 = vld [vmem:[#allocation5 + $0x160] sm:$0xff]
    %v84 = vld [vmem:[#allocation5 + $0x168] sm:$0xff]
    %v85 = vld [vmem:[#allocation5 + $0x170] sm:$0xff]
    %v86 = vld [vmem:[#allocation5 + $0x178] sm:$0xff]
    %v87 = vld [vmem:[#allocation5 + $0x180] sm:$0xff]
    %v88 = vld [vmem:[#allocation5 + $0x188] sm:$0xff]
    %v89 = vld [vmem:[#allocation5 + $0x190] sm:$0xff]
    %v90 = vld [vmem:[#allocation5 + $0x198] sm:$0xff]
    %v91 = vld [vmem:[#allocation5 + $0x1a0] sm:$0xff]
    %v92 = vld [vmem:[#allocation5 + $0x1a8] sm:$0xff]
    %v93 = vld [vmem:[#allocation5 + $0x1b0] sm:$0xff]
    %v94 = vld [vmem:[#allocation5 + $0x1b8] sm:$0xff]
    %v95 = vld [vmem:[#allocation5 + $0x1c0] sm:$0xff]
    %v96 = vld [vmem:[#allocation5 + $0x1c8] sm:$0xff]
    %v97 = vld [vmem:[#allocation5 + $0x1d0] sm:$0xff]
    %v98 = vld [vmem:[#allocation5 + $0x1d8] sm:$0xff]
    %v99 = vld [vmem:[#allocation5 + $0x1e0] sm:$0xff]
    %v100 = vld [vmem:[#allocation5 + $0x1e8] sm:$0xff]
    %v101 = vld [vmem:[#allocation5 + $0x1f0] sm:$0xff]
    %v102 = vld [vmem:[#allocation5 + $0x1f8] sm:$0xff]
    %v105 = vunpack.c.l.s4 1983009808
    %v106 = vunpack.c.0.s8 %v105
    %v107 = vlaneseq
    %v108 = vshrl.u32 %v107, 7
    %v109 = vsub.s32 %v106, %v108
    %v110 = vrot.slane %v38, %v109
    %v111 = vcombine.high %v110, %v110
    %114 = vmatprep.subr.mxu0 %v40
    %115 = vmatpush1.msra.mxu0 %v39
    %116 = vmatprep.subr.mxu0 %v42
    %117 = vmatpush1.msra.mxu0 %v41
    %118 = vmatprep.subr.mxu0 %v44
    %119 = vmatpush1.msra.mxu0 %v43
    %120 = vmatprep.subr.mxu0 %v46
    %121 = vmatpush1.msra.mxu0 %v45
    %122 = vmatprep.subr.mxu0 %v48
    %123 = vmatpush1.msra.mxu0 %v47
    %124 = vmatprep.subr.mxu0 %v50
    %125 = vmatpush1.msra.mxu0 %v49
    %126 = vmatprep.subr.mxu0 %v52
    %127 = vmatpush1.msra.mxu0 %v51
    %128 = vmatprep.subr.mxu0 %v54
    %129 = vmatpush1.msra.mxu0 %v53
    %130 = vmatprep.subr.mxu0 %v56
    %131 = vmatpush1.msra.mxu0 %v55
    %132 = vmatprep.subr.mxu0 %v58
    %133 = vmatpush1.msra.mxu0 %v57
    %134 = vmatprep.subr.mxu0 %v60
    %135 = vmatpush1.msra.mxu0 %v59
    %136 = vmatprep.subr.mxu0 %v62
    %137 = vmatpush1.msra.mxu0 %v61
    %138 = vmatprep.subr.mxu0 %v64
    %139 = vmatpush1.msra.mxu0 %v63
    %140 = vmatprep.subr.mxu0 %v66
    %141 = vmatpush1.msra.mxu0 %v65
    %142 = vmatprep.subr.mxu0 %v68
    %143 = vmatpush1.msra.mxu0 %v67
    %144 = vmatprep.subr.mxu0 %v70
    %145 = vmatpush1.msra.mxu0 %v69
    %146 = vmatprep.subr.mxu0 %v72
    %147 = vmatpush1.msra.mxu0 %v71
    %148 = vmatprep.subr.mxu0 %v74
    %149 = vmatpush1.msra.mxu0 %v73
    %150 = vmatprep.subr.mxu0 %v76
    %151 = vmatpush1.msra.mxu0 %v75
    %152 = vmatprep.subr.mxu0 %v78
    %153 = vmatpush1.msra.mxu0 %v77
    %154 = vmatprep.subr.mxu0 %v80
    %155 = vmatpush1.msra.mxu0 %v79
    %156 = vmatprep.subr.mxu0 %v82
    %157 = vmatpush1.msra.mxu0 %v81
    %158 = vmatprep.subr.mxu0 %v84
    %159 = vmatpush1.msra.mxu0 %v83
    %160 = vmatprep.subr.mxu0 %v86
    %161 = vmatpush1.msra.mxu0 %v85
    %162 = vmatprep.subr.mxu0 %v88
    %163 = vmatpush1.msra.mxu0 %v87
    %164 = vmatprep.subr.mxu0 %v90
    %165 = vmatpush1.msra.mxu0 %v89
    %166 = vmatprep.subr.mxu0 %v92
    %167 = vmatpush1.msra.mxu0 %v91
    %168 = vmatprep.subr.mxu0 %v94
    %169 = vmatpush1.msra.mxu0 %v93
    %170 = vmatprep.subr.mxu0 %v96
    %171 = vmatpush1.msra.mxu0 %v95
    %172 = vmatprep.subr.mxu0 %v98
    %173 = vmatpush1.msra.mxu0 %v97
    %174 = vmatprep.subr.mxu0 %v100
    %175 = vmatpush1.msra.mxu0 %v99
    %176 = vmatprep.subr.mxu0 %v102
    %177 = vmatpush1.msra.mxu0 %v101
    %178 = vmatprep.mubr.f32.mxu0 %v111
    %179 = vmatmul.mubr.f32.gmra.mrb[0].mxu0 %v110
    %v180 = vpop.f32.mrb[0].mxu0
    %v181 = vadd.f32 0.0, %v180
    %v182 = vpop.f32.mrb[0].mxu0
    %v183 = vadd.f32 0.0, %v182
    %184 = vdwg.mxu0
    %v187 = vcombine.low %v181, %v183
    %v189 = vunpack.c.l.s4 1983009808
    %v190 = vunpack.c.0.s8 %v189
    %v191 = vlaneseq
    %v192 = vshrl.u32 %v191, 7
    %v193 = vsub.s32 %v190, %v192
    %v194 = vrot.slane %v187, %v193
    %196 = vst [vmem:[#allocation7] sm:$0xf] %v194
    // Predicated region
    $region18: #{tpu_custom_call.1} parent=1 // pred_check
      _
    $region19: #{tpu_custom_call.1} parent=1 // pred_check_branch
      %198 = sbr.rel (0) target = $region21
    $region20: #{tpu_custom_call.1} parent=1 // pred_region
      %s200 = ssub.s32 64, 64
      %201 = vsyncadd [#allocation4], %s200
      %s203 = sshll.u32 [#allocation7], 4
      %s204 = int_to_ptr.vmem [resolvable:$true] %s203
      %206 = dma.vmem_to_hbm [thread:$0]  %s204, 64, %s2, [#allocation4]
    $region21: #{tpu_custom_call.1} parent=1 // pred_fallthru
      _
    // Predicated region
    $region22: #{tpu_custom_call.1} parent=1 // pred_check
      _
    $region23: #{tpu_custom_call.1} parent=1 // pred_check_branch
      %208 = sbr.rel (0) target = $region25
    $region24: #{tpu_custom_call.1} parent=1 // pred_region
      %209 = dma.done [#allocation4], 64
    $region25: #{tpu_custom_call.1} parent=1 // pred_fallthru
      _
    %210 = vsyncpa [#allocation3], 1
    %211 = vsyncpa [#allocation6], 1
    %212 = vsyncpa [#allocation4], 1

</llo_original>
